<compile_context>
chip_gen: v6e
topology: v6e:2x2x1
jax: 0.10.0
libtpu: 0.0.40
codegen_flags: <defaults>
</compile_context>

<pallas_src>
import functools

import jax
import jax.numpy as jnp
from jax import lax
from jax.experimental import pallas as pl
from jax.experimental.pallas import tpu as pltpu


def _round_up(a, b):
  return ((a + b - 1) // b) * b


# Modest scoped-VMEM request: safe on v5e (128 MiB phys), v6e (128), v7x (64).
_VMEM_LIMIT = 32 * 1024 * 1024


def _row_tile(n_rows, n_cols, itemsize, budget_bytes):
  """Rows per block so one VMEM block is ~budget_bytes (lane-padded footprint)."""
  lane_bytes = _round_up(max(int(n_cols), 1), 128) * int(itemsize)
  rows = max(8, (int(budget_bytes) // lane_bytes) // 8 * 8)
  return int(min(rows, _round_up(max(int(n_rows), 1), 8)))


# ---------------------------------------------------------------------------
# Kernel 1: row-wise softmax cross-entropy statistics (CrossEntropy / Poly1 /
# Focal).  Per grid step it writes ONE (8,128) block whose lanes hold the
# per-tile partial sums: lane0 = sum(w*CE), lane1 = sum(w), lane2 = sum(pt).
# ---------------------------------------------------------------------------
def _ce_stats_kernel(x_ref, lab_ref, *rest, n_rows, tile_n, has_weight, need_pt):
  if has_weight:
    w_ref, out_ref = rest
  else:
    (out_ref,) = rest

  x = x_ref[...].astype(jnp.float32)          # [tile_n, C] (native dtype in HBM)
  lab = lab_ref[...]                          # [tile_n, 1] int32 class ids

  # One-hot mask kept as bool (no f32 one-hot temporary).
  col = lax.broadcasted_iota(jnp.int32, x.shape, 1)
  onehot = col == lab

  # Row-wise stable log-sum-exp / softmax statistics.
  m = jnp.max(x, axis=1, keepdims=True)
  ez = jnp.exp(x - m)                                   # EUP
  se = jnp.sum(ez, axis=1, keepdims=True)               # XLU
  lse = jnp.log(se)                                     # EUP
  x_true = jnp.sum(jnp.where(onehot, x, 0.0), axis=1, keepdims=True)
  ce = (m - x_true) + lse                               # -log softmax[label] >= 0

  # Overhanging last block: OOB rows contain unspecified data, so select (not
  # multiply) the final per-row terms to zero.
  row = (pl.program_id(0) * tile_n
         + lax.broadcasted_iota(jnp.int32, (x.shape[0], 1), 0))
  valid = row < n_rows

  if has_weight:
    w = w_ref[...].astype(jnp.float32)        # per-row weight, gathered in wrapper
    wce = jnp.sum(jnp.where(valid, w * ce, 0.0))
    wsum = jnp.sum(jnp.where(valid, w, 0.0))
  else:
    wce = jnp.sum(jnp.where(valid, ce, 0.0))
    wsum = jnp.sum(valid.astype(jnp.float32))           # count of valid rows

  if need_pt:
    pt = jnp.exp(x_true - m) * pl.reciprocal(se, approx=True)  # softmax[label]
    pt_sum = jnp.sum(jnp.where(valid, pt, 0.0))
  else:
    pt_sum = 0.0

  lane = lax.broadcasted_iota(jnp.int32, (8, 128), 1)
  out_ref[...] = jnp.where(
      lane == 0, wce,
      jnp.where(lane == 1, wsum, jnp.where(lane == 2, pt_sum, 0.0)))


def _softmax_ce_stats(logits, labels, weight=None, need_pt=False):
  """Returns (sum_i w_i*CE_i, sum_i w_i, sum_i pt_i) over the batch."""
  n, c = logits.shape
  itemsize = jnp.dtype(logits.dtype).itemsize
  # ~4 MiB logits block (double-buffered -> 8 MiB), no wrapper pad/cast of the
  # logits; the last block overhangs and is masked in-kernel.
  # TODO(synk): for vocab-scale C add a class-dim grid axis ('arbitrary') with
  # an online logsumexp carry to avoid the v7x VMEM cliff at huge C.
  tile_n = _row_tile(n, c, itemsize, 4 << 20)
  grid = pl.cdiv(n, tile_n)

  lab = labels.astype(jnp.int32).reshape(n, 1)          # tiny O(N)
  has_weight = weight is not None

  ops = [logits, lab]
  in_specs = [
      pl.BlockSpec((tile_n, c), lambda i: (i, 0)),      # native dtype, full C
      pl.BlockSpec((tile_n, 1), lambda i: (i, 0)),
  ]
  if has_weight:
    # Hoisted class-weight gather: tiny O(N) op outside the kernel.
    w_row = weight.astype(jnp.float32)[labels.astype(jnp.int32)].reshape(n, 1)
    ops.append(w_row)
    in_specs.append(pl.BlockSpec((tile_n, 1), lambda i: (i, 0)))

  kernel = functools.partial(_ce_stats_kernel, n_rows=n, tile_n=tile_n,
                             has_weight=has_weight, need_pt=need_pt)
  out = pl.pallas_call(
      kernel,
      out_shape=jax.ShapeDtypeStruct((8 * grid, 128), jnp.float32),
      grid=(grid,),
      in_specs=in_specs,
      out_specs=pl.BlockSpec((8, 128), lambda i: (i, 0)),
      compiler_params=pltpu.CompilerParams(
          dimension_semantics=("parallel",),
          vmem_limit_bytes=_VMEM_LIMIT),
  )(*ops)
  wce = out[0::8, 0].sum()
  wsum = out[0::8, 1].sum()
  pt = out[0::8, 2].sum()
  return wce, wsum, pt


# ---------------------------------------------------------------------------
# Kernel 2: sigmoid focal loss (SigmoidFocalLoss, reduction='mean').
# Runs either directly on [N, C] blocks (C >= 128) or on a lane-dense [M, 128]
# flattening for tiny C.  Per grid step it writes one per-tile partial sum.
# ---------------------------------------------------------------------------
def _sigmoid_focal_kernel(x_ref, y_ref, out_ref, *, alpha, gamma, n_rows,
                          tile_n, mask_rows):
  x = x_ref[...].astype(jnp.float32)
  y = y_ref[...].astype(jnp.float32)

  # Share exp(-|x|) between the sigmoid and the stable BCE-with-logits term.
  e = jnp.exp(-jnp.abs(x))                              # EUP
  denom = 1.0 + e
  inv = pl.reciprocal(denom, approx=True)               # EUP (cheap slot)
  p = jnp.where(x >= 0, inv, e * inv)                   # sigmoid(x)
  ce = jnp.maximum(x, 0.0) - x * y + jnp.log(denom)     # == log1p(e)

  # 1 - p_t with p_t = p*y + (1-p)*(1-y)
  one_m_pt = p + y - 2.0 * p * y

  # (1 - p_t)**gamma: integer gamma -> pure VALU multiplies (no exp/log chain).
  if float(gamma) == int(gamma) and int(gamma) >= 1:
    pg = one_m_pt
    for _ in range(int(gamma) - 1):
      pg = pg * one_m_pt
  else:
    # approx reciprocal can push p marginally above 1 -> clamp before power.
    pg = jnp.power(jnp.maximum(one_m_pt, 0.0), gamma)

  loss = ce * pg
  if alpha > 0:
    # alpha_t = alpha*y + (1-alpha)*(1-y) = (1-alpha) + (2*alpha-1)*y
    loss = ((1.0 - alpha) + (2.0 * alpha - 1.0) * y) * loss

  if mask_rows:
    # Only for the [N, C] path when the last block overhangs the batch.
    row = (pl.program_id(0) * tile_n
           + lax.broadcasted_iota(jnp.int32, (x.shape[0], 1), 0))
    loss = jnp.where(row < n_rows, loss, 0.0)

  out_ref[...] = jnp.full((8, 128), jnp.sum(loss), dtype=jnp.float32)


def _sigmoid_focal_mean(logits, targets, *, gamma=2.0, alpha=0.25):
  assert logits.shape == targets.shape
  total = int(logits.size)
  itemsize = jnp.dtype(logits.dtype).itemsize
  common = dict(alpha=float(alpha), gamma=float(gamma))

  if logits.ndim == 2 and logits.shape[1] >= 128:
    # Direct [N, C] path: no flatten / pad / astype relayout at all.
    n, c = logits.shape
    tile_n = _row_tile(n, c, itemsize, 3 << 20)   # 2 inputs x 2 bufs x 3 MiB
    grid = pl.cdiv(n, tile_n)
    kernel = functools.partial(_sigmoid_focal_kernel, n_rows=n, tile_n=tile_n,
                               mask_rows=(n % tile_n != 0), **common)
    x, y = logits, targets
    block = (tile_n, c)
  else:
    # Tiny class dim: lane-dense [M, 128] flatten.  Pad x with -1e4 and y with
    # 0 so padded elements contribute exactly 0 -> no in-kernel mask needed.
    m = pl.cdiv(total, 128)
    tile_n = _row_tile(m, 128, itemsize, 3 << 20)
    m_pad = _round_up(m, tile_n)
    pad = m_pad * 128 - total
    x = jnp.pad(logits.reshape(-1), (0, pad),
                constant_values=-1e4).reshape(m_pad, 128)
    y = jnp.pad(targets.reshape(-1), (0, pad)).reshape(m_pad, 128)
    grid = m_pad // tile_n
    kernel = functools.partial(_sigmoid_focal_kernel, n_rows=m_pad,
                               tile_n=tile_n, mask_rows=False, **common)
    block = (tile_n, 128)

  spec = pl.BlockSpec(block, lambda i: (i, 0))
  out = pl.pallas_call(
      kernel,
      out_shape=jax.ShapeDtypeStruct((8 * grid, 128), jnp.float32),
      grid=(grid,),
      in_specs=[spec, spec],
      out_specs=pl.BlockSpec((8, 128), lambda i: (i, 0)),
      compiler_params=pltpu.CompilerParams(
          dimension_semantics=("parallel",),
          vmem_limit_bytes=_VMEM_LIMIT),
  )(x, y)
  return out[0::8, 0].sum() / total


# ---------------------------------------------------------------------------
# Loss wrappers mirroring the PyTorch criteria.
# ---------------------------------------------------------------------------
def cross_entropy_mean(logits, labels, weight=None):
  wce, wsum, _ = _softmax_ce_stats(logits, labels, weight, need_pt=False)
  return wce / wsum                                   # weighted mean (torch semantics)


def poly1_cross_entropy_mean(logits, labels, *, epsilon=1.0, weight=None):
  n = logits.shape[0]
  wce, _, pt = _softmax_ce_stats(logits, labels, weight, need_pt=True)
  return (wce + epsilon * (n - pt)) / n               # plain mean of CE_i + eps*(1-pt_i)


def focal_loss_mean(logits, labels, *, gama=1.5, alpha=0.25):
  wce, wsum, _ = _softmax_ce_stats(logits, labels, None, need_pt=False)
  logp = wce / wsum                                   # scalar mean CE
  # Scalar post-transform of FocalLoss stays in plain JAX (a kernel is overkill).
  p = jnp.exp(-logp)
  return (1.0 - p) ** gama * alpha * logp             # .mean() of a scalar is itself


class ClassificationLoss:
  """JAX/Pallas port of ClassificationLoss.forward.

  `loss`, `num_classes`, `class_weights` mirror args.loss, args.num_classes and
  args.loss_with_cls_weight (comma-separated string or list) of the original.
  """

  def __init__(self, loss="CrossEntropy", num_classes=None, class_weights=None):
    if loss not in ("CrossEntropy", "Poly1CrossEntropyLoss", "Focal",
                    "SigmoidFocal"):
      raise ValueError("{} not superised".format(loss))
    self.loss = loss
    self.num_classes = num_classes
    if class_weights is None or class_weights == "":
      self.weight = None
    else:
      if isinstance(class_weights, str):
        class_weights = [float(v) for v in class_weights.split(",")]
      self.weight = jnp.asarray(class_weights, jnp.float32)

  def __call__(self, input, target):
    if self.loss == "CrossEntropy":
      return cross_entropy_mean(input, target, weight=self.weight)
    if self.loss == "Poly1CrossEntropyLoss":
      return poly1_cross_entropy_mean(input, target, epsilon=1.0,
                                      weight=self.weight)
    if self.loss == "Focal":
      return focal_loss_mean(input, target)           # FocalLoss() takes no weight
    return _sigmoid_focal_mean(input, target, gamma=2.0, alpha=0.25)


# ---------------------------------------------------------------------------
# Pure-JAX references for the correctness check.
# ---------------------------------------------------------------------------
def _ref_ce_stats(logits, labels, weight=None):
  x = logits.astype(jnp.float32)
  logp = jax.nn.log_softmax(x, axis=-1)
  nll = -jnp.take_along_axis(logp, labels[:, None], axis=-1)[:, 0]
  w = jnp.ones_like(nll) if weight is None else weight[labels]
  pt = jnp.take_along_axis(jax.nn.softmax(x, axis=-1), labels[:, None], -1)[:, 0]
  return nll, w, pt


def _ref_cross_entropy(logits, labels, weight=None):
  nll, w, _ = _ref_ce_stats(logits, labels, weight)
  return (w * nll).sum() / w.sum()


def _ref_poly1(logits, labels, epsilon=1.0, weight=None):
  nll, w, pt = _ref_ce_stats(logits, labels, weight)
  return (w * nll + epsilon * (1.0 - pt)).mean()


def _ref_focal(logits, labels, gama=1.5, alpha=0.25):
  nll, _, _ = _ref_ce_stats(logits, labels, None)
  logp = nll.mean()
  p = jnp.exp(-logp)
  return (1.0 - p) ** gama * alpha * logp


def _ref_sigmoid_focal(x, y, gamma=2.0, alpha=0.25):
  x = x.astype(jnp.float32)
  y = y.astype(jnp.float32)
  p = jax.nn.sigmoid(x)
  ce = jnp.maximum(x, 0.0) - x * y + jnp.log1p(jnp.exp(-jnp.abs(x)))
  pt = p * y + (1.0 - p) * (1.0 - y)
  loss = ce * (1.0 - pt) ** gamma
  loss = (alpha * y + (1.0 - alpha) * (1.0 - y)) * loss
  return loss.mean()


if __name__ == "__main__":
  num_classes = 16
  batch = 8

  key = jax.random.PRNGKey(0)
  k1, k2, k3, k4 = jax.random.split(key, 4)
  logits = jax.random.normal(k1, (batch, num_classes), dtype=jnp.float32)
  labels = jax.random.randint(k2, (batch,), 0, num_classes, dtype=jnp.int32)
  # BCEWithLogits-style dense float targets for the SigmoidFocal path.
  sigmoid_targets = jax.nn.one_hot(labels, num_classes, dtype=jnp.float32)
  # Wide-C inputs to exercise the direct [N, C] sigmoid-focal path.
  logits_wide = jax.random.normal(k3, (batch, 128), dtype=jnp.float32)
  targets_wide = jax.random.uniform(k4, (batch, 128), dtype=jnp.float32)

  class_w_list = [0.5 + 0.1 * i for i in range(num_classes)]
  class_w_str = ",".join(str(v) for v in class_w_list)
  class_w = jnp.asarray(class_w_list, jnp.float32)

  checks = []

  crit = ClassificationLoss("CrossEntropy", num_classes=num_classes,
                            class_weights=class_w_str)
  checks.append((jax.block_until_ready(crit(logits, labels)),
                 _ref_cross_entropy(logits, labels, class_w)))

  crit = ClassificationLoss("Poly1CrossEntropyLoss", num_classes=num_classes)
  checks.append((jax.block_until_ready(crit(logits, labels)),
                 _ref_poly1(logits, labels)))

  crit = ClassificationLoss("Poly1CrossEntropyLoss", num_classes=num_classes,
                            class_weights=class_w_str)
  checks.append((jax.block_until_ready(crit(logits, labels)),
                 _ref_poly1(logits, labels, weight=class_w)))

  crit = ClassificationLoss("Focal", num_classes=num_classes)
  checks.append((jax.block_until_ready(crit(logits, labels)),
                 _ref_focal(logits, labels)))

  crit = ClassificationLoss("SigmoidFocal", num_classes=num_classes)
  checks.append((jax.block_until_ready(crit(logits, sigmoid_targets)),
                 _ref_sigmoid_focal(logits, sigmoid_targets)))
  checks.append((jax.block_until_ready(crit(logits_wide, targets_wide)),
                 _ref_sigmoid_focal(logits_wide, targets_wide)))

  for got, ref in checks:
    assert bool(jnp.isfinite(got)), (got, ref)
    assert jnp.allclose(got, ref, rtol=5e-3, atol=5e-4), (got, ref)

  print("KERNEL_OK")
</pallas_src>

<mosaic_0001>
module attributes {stable_mosaic.version = 11 : i64} {
  func.func @_ce_stats_kernel(%arg0: i32, %arg1: memref<8x16xf32, #tpu.memory_space<vmem>>, %arg2: memref<8x1xi32, #tpu.memory_space<vmem>>, %arg3: memref<8x1xf32, #tpu.memory_space<vmem>>, %arg4: memref<8x128xf32, #tpu.memory_space<vmem>>) attributes {dimension_semantics = [#tpu.dimension_semantics<parallel>], iteration_bounds = array<i64: 1>, scalar_prefetch = 0 : i64, scratch_operands = 0 : i64, tpu.core_type = #tpu.core_type<tc>, window_params = [{transform_indices = @transform_0, window_bounds = array<i64: 8, 16>}, {transform_indices = @transform_1, window_bounds = array<i64: 8, 1>}, {transform_indices = @transform_2, window_bounds = array<i64: 8, 1>}, {transform_indices = @transform_3, window_bounds = array<i64: 8, 128>}]} {
    %c0 = arith.constant 0 : index
    %c0_0 = arith.constant 0 : index
    %0 = vector.load %arg1[%c0, %c0_0] : memref<8x16xf32, #tpu.memory_space<vmem>>, vector<8x16xf32>
    %c0_1 = arith.constant 0 : index
    %c0_2 = arith.constant 0 : index
    %1 = vector.load %arg2[%c0_1, %c0_2] : memref<8x1xi32, #tpu.memory_space<vmem>>, vector<8x1xi32>
    %2 = tpu.iota {dimensions = array<i32: 1>} : vector<8x16xi32>
    %3 = vector.broadcast %1 : vector<8x1xi32> to vector<8x16xi32>
    %4 = arith.cmpi eq, %2, %3 : vector<8x16xi32>
    %cst = arith.constant dense<0xFF800000> : vector<8xf32>
    %5 = vector.multi_reduction <maximumf>, %0, %cst [1] : vector<8x16xf32> to vector<8xf32>
    %6 = vector.shape_cast %5 : vector<8xf32> to vector<8x1xf32>
    %7 = vector.broadcast %6 : vector<8x1xf32> to vector<8x16xf32>
    %8 = arith.subf %0, %7 : vector<8x16xf32>
    %9 = math.exp %8 : vector<8x16xf32>
    %cst_3 = arith.constant dense<0.000000e+00> : vector<8xf32>
    %10 = vector.multi_reduction <add>, %9, %cst_3 [1] : vector<8x16xf32> to vector<8xf32>
    %11 = vector.shape_cast %10 : vector<8xf32> to vector<8x1xf32>
    %12 = math.log %11 : vector<8x1xf32>
    %cst_4 = arith.constant 0.000000e+00 : f32
    %13 = vector.broadcast %cst_4 : f32 to vector<8x16xf32>
    %14 = arith.select %4, %0, %13 : vector<8x16xi1>, vector<8x16xf32>
    %cst_5 = arith.constant dense<0.000000e+00> : vector<8xf32>
    %15 = vector.multi_reduction <add>, %14, %cst_5 [1] : vector<8x16xf32> to vector<8xf32>
    %16 = vector.shape_cast %15 : vector<8xf32> to vector<8x1xf32>
    %17 = arith.subf %6, %16 : vector<8x1xf32>
    %18 = arith.addf %17, %12 : vector<8x1xf32>
    %c8_i32 = arith.constant 8 : i32
    %19 = arith.muli %arg0, %c8_i32 : i32
    %20 = tpu.iota {dimensions = array<i32: 0>} : vector<8x1xi32>
    %21 = vector.broadcast %19 : i32 to vector<8x1xi32>
    %22 = arith.addi %21, %20 : vector<8x1xi32>
    %c8_i32_6 = arith.constant 8 : i32
    %23 = vector.broadcast %c8_i32_6 : i32 to vector<8x1xi32>
    %24 = arith.cmpi slt, %22, %23 : vector<8x1xi32>
    %c0_7 = arith.constant 0 : index
    %c0_8 = arith.constant 0 : index
    %25 = vector.load %arg3[%c0_7, %c0_8] : memref<8x1xf32, #tpu.memory_space<vmem>>, vector<8x1xf32>
    %26 = arith.mulf %25, %18 : vector<8x1xf32>
    %cst_9 = arith.constant 0.000000e+00 : f32
    %27 = vector.broadcast %cst_9 : f32 to vector<8x1xf32>
    %28 = arith.select %24, %26, %27 : vector<8x1xi1>, vector<8x1xf32>
    %29 = vector.shape_cast %28 : vector<8x1xf32> to vector<1x8x1xf32>
    %cst_10 = arith.constant dense<0.000000e+00> : vector<1xf32>
    %30 = vector.multi_reduction <add>, %29, %cst_10 [1, 2] : vector<1x8x1xf32> to vector<1xf32>
    %31 = vector.shape_cast %30 : vector<1xf32> to vector<1x1x1xf32>
    %32 = vector.extract %31[0, 0, 0] : f32 from vector<1x1x1xf32>
    %cst_11 = arith.constant 0.000000e+00 : f32
    %33 = vector.broadcast %cst_11 : f32 to vector<8x1xf32>
    %34 = arith.select %24, %25, %33 : vector<8x1xi1>, vector<8x1xf32>
    %35 = vector.shape_cast %34 : vector<8x1xf32> to vector<1x8x1xf32>
    %cst_12 = arith.constant dense<0.000000e+00> : vector<1xf32>
    %36 = vector.multi_reduction <add>, %35, %cst_12 [1, 2] : vector<1x8x1xf32> to vector<1xf32>
    %37 = vector.shape_cast %36 : vector<1xf32> to vector<1x1x1xf32>
    %38 = vector.extract %37[0, 0, 0] : f32 from vector<1x1x1xf32>
    %39 = tpu.iota {dimensions = array<i32: 1>} : vector<8x128xi32>
    %c0_i32 = arith.constant 0 : i32
    %40 = vector.broadcast %c0_i32 : i32 to vector<8x128xi32>
    %41 = arith.cmpi eq, %39, %40 : vector<8x128xi32>
    %c1_i32 = arith.constant 1 : i32
    %42 = vector.broadcast %c1_i32 : i32 to vector<8x128xi32>
    %43 = arith.cmpi eq, %39, %42 : vector<8x128xi32>
    %c2_i32 = arith.constant 2 : i32
    %44 = vector.broadcast %c2_i32 : i32 to vector<8x128xi32>
    %45 = arith.cmpi eq, %39, %44 : vector<8x128xi32>
    %cst_13 = arith.constant 0.000000e+00 : f32
    %cst_14 = arith.constant 0.000000e+00 : f32
    %46 = vector.broadcast %cst_13 : f32 to vector<8x128xf32>
    %47 = vector.broadcast %cst_14 : f32 to vector<8x128xf32>
    %48 = arith.select %45, %46, %47 : vector<8x128xi1>, vector<8x128xf32>
    %49 = vector.broadcast %38 : f32 to vector<8x128xf32>
    %50 = arith.select %43, %49, %48 : vector<8x128xi1>, vector<8x128xf32>
    %51 = vector.broadcast %32 : f32 to vector<8x128xf32>
    %52 = arith.select %41, %51, %50 : vector<8x128xi1>, vector<8x128xf32>
    %c0_15 = arith.constant 0 : index
    %c0_16 = arith.constant 0 : index
    %53 = vector.load %arg4[%c0_15, %c0_16] : memref<8x128xf32, #tpu.memory_space<vmem>>, vector<8x128xf32>
    tpu.vector_store %arg4[%c0_15, %c0_16], %52 {strides = array<i32>} : memref<8x128xf32, #tpu.memory_space<vmem>>, vector<8x128xf32>,
    return
  }
  func.func @transform_0(%arg0: i32) -> (i32, i32) {
    %c0_i32 = arith.constant 0 : i32
    %c0_i32_0 = arith.constant 0 : i32
    return %arg0, %c0_i32 : i32, i32
  }
  func.func @transform_1(%arg0: i32) -> (i32, i32) {
    %c0_i32 = arith.constant 0 : i32
    %c0_i32_0 = arith.constant 0 : i32
    return %arg0, %c0_i32 : i32, i32
  }
  func.func @transform_2(%arg0: i32) -> (i32, i32) {
    %c0_i32 = arith.constant 0 : i32
    %c0_i32_0 = arith.constant 0 : i32
    return %arg0, %c0_i32 : i32, i32
  }
  func.func @transform_3(%arg0: i32) -> (i32, i32) {
    %c0_i32 = arith.constant 0 : i32
    %c0_i32_0 = arith.constant 0 : i32
    return %arg0, %c0_i32 : i32, i32
  }
}

</mosaic_0001>

<llo_original>
// kernel: tpu_custom_call.1
$region0: #{tpu_custom_call.1}
  #allocation0 [shape = 'u32[]', space=smem, size = 0x4, offset = 0x4, fixed_abs, tag = 'smem constant byte address 0x4 - core index']
  #allocation1 [shape = 'u32[144,128]{1,0:T(1,128)}', space=vmem, size = 0x12000, scoped, tag = 'internal scratch']
  %s0 = inlined_call_operand.vmem [shape: f32[8,16], index: 0, kind: input, shape index: {}]
  %s1 = inlined_call_operand.vmem [shape: s32[8,1], index: 1, kind: input, shape index: {}]
  %s2 = inlined_call_operand.vmem [shape: f32[8,1], index: 2, kind: input, shape index: {}]
  %s3 = inlined_call_operand.hbm [shape: f32[8,128], index: 3, kind: output, shape index: {}]
  %s4 = sld [smem:[#allocation0]]
  $region22: #{tpu_custom_call.1} parent=0
    _
  %s6 = ssub.s32 1, %s4
  %s7 = scalar_select 0, %s6, %s4
  $region1: #{tpu_custom_call.1} parent=0
    #allocation2 [shape = 'u8[4096]{0}', space=vmem, size = 0x1000, scoped, tag = 'output window, operand 0, single buffered']
    #allocation3 [shape = 's32[1]{0}', space=sflag, size = 0x4, scoped, tag = 'scoped memory for tpu_custom_call.1']
    %8 = vsyncpa [#allocation3], 0
    // Predicated region
    $region2: #{tpu_custom_call.1} parent=1 // pred_check
      _
    $region3: #{tpu_custom_call.1} parent=1 // pred_check_branch
      %10 = sbr.rel (0) target = $region5
    $region4: #{tpu_custom_call.1} parent=1 // pred_region
      _
    $region5: #{tpu_custom_call.1} parent=1 // pred_fallthru
      _
    // Predicated region
    $region6: #{tpu_custom_call.1} parent=1 // pred_check
      _
    $region7: #{tpu_custom_call.1} parent=1 // pred_check_branch
      %12 = sbr.rel (0) target = $region9
    $region8: #{tpu_custom_call.1} parent=1 // pred_region
      _
    $region9: #{tpu_custom_call.1} parent=1 // pred_fallthru
      _
    // Predicated region
    $region10: #{tpu_custom_call.1} parent=1 // pred_check
      _
    $region11: #{tpu_custom_call.1} parent=1 // pred_check_branch
      %14 = sbr.rel (0) target = $region13
    $region12: #{tpu_custom_call.1} parent=1 // pred_region
      _
    $region13: #{tpu_custom_call.1} parent=1 // pred_fallthru
      _
    %v15 = vld [vmem:[%s0] sm:$0xff]
    %v16 = vld [vmem:[%s1] sm:$0xff]
    %v17 = vlaneseq
    %v18 = vand.u32 %v17, 127
    %19 = vset.pattern.permute.xlu0 0
    %20 = vperm.xlu0 %19, %v16
    %v21 = vpop.permute.xlu0 %20
    %vm22 = vcmp.eq.s32.totalorder %v18, %v21
    %vm23 = vcmask 130048
    %v24 = vsel %vm23, %v15, -inf
    %25 = vmax.xlane.f32.xlu0 %v24
    %v26 = vpop.xlane.xlu0 %25
    %v27 = vsub.f32 %v15, %v26
    %v28 = vmul.f32 %v27, 1.442695
    %v29 = vpow.pop %v28
    %v30 = vsel %vm23, %v29, 0.0
    %31 = vadd.xlane.f32.xlu0 %v30
    %v32 = vpop.xlane.xlu0 %31
    %v33 = vlog2.pop %v32
    %v34 = vmul.f32 %v33, 0.6931472
    %v35 = vsel %vm22, %v15, 0.0
    %v36 = vsel %vm23, %v35, 0.0
    %37 = vadd.xlane.f32.xlu0 %v36
    %v38 = vpop.xlane.xlu0 %37
    %v39 = vsub.f32 %v26, %v38
    %v40 = vadd.f32 %v39, %v34
    %s41 = smul.u32 0, 8
    %v42 = vlaneseq
    %v43 = vshrl.u32 %v42, 7
    %v44 = vstv %s41
    %v45 = vadd.s32 %v44, %v43
    %vm46 = vcmp.lt.s32.totalorder %v45, 8
    %v47 = vld [vmem:[%s2] sm:$0xff]
    %v48 = vmul.f32 %v47, %v40
    %v49 = vsel %vm46, %v48, 0.0
    %vm50 = vcmask 7168
    %v51 = vsel %vm50, %v49, 0.0
    %52 = vadd.xlane.f32.xlu0 %v51
    %v53 = vpop.xlane.xlu0 %52
    %v54 = vrot.slane %v53, 4
    %v55 = vadd.f32 %v53, %v54
    %v56 = vrot.slane %v55, 2
    %v57 = vadd.f32 %v55, %v56
    %v58 = vrot.slane %v57, 1
    %v59 = vadd.f32 %v57, %v58
    %s60 = vtos %v59
    %v61 = vsel %vm46, %v47, 0.0
    %v62 = vsel %vm50, %v61, 0.0
    %63 = vadd.xlane.f32.xlu0 %v62
    %v64 = vpop.xlane.xlu0 %63
    %v65 = vrot.slane %v64, 4
    %v66 = vadd.f32 %v64, %v65
    %v67 = vrot.slane %v66, 2
    %v68 = vadd.f32 %v66, %v67
    %v69 = vrot.slane %v68, 1
    %v70 = vadd.f32 %v68, %v69
    %s71 = vtos %v70
    %vm72 = vcmp.eq.s32.totalorder %v18, 0
    %vm73 = vcmp.eq.s32.totalorder %v18, 1
    %v74 = vstv %s71
    %v75 = vsel %vm73, %v74, 0.0
    %v76 = vstv %s60
    %v77 = vsel %vm72, %v76, %v75
    %78 = vst [vmem:[#allocation2] sm:$0xff] %v77
    // Predicated region
    $region14: #{tpu_custom_call.1} parent=1 // pred_check
      _
    $region15: #{tpu_custom_call.1} parent=1 // pred_check_branch
      %80 = sbr.rel (0) target = $region17
    $region16: #{tpu_custom_call.1} parent=1 // pred_region
      %s82 = ssub.s32 128, 128
      %83 = vsyncadd [#allocation3], %s82
      %s85 = sshll.u32 [#allocation2], 4
      %s86 = int_to_ptr.vmem [resolvable:$true] %s85
      %88 = dma.vmem_to_hbm [thread:$0]  %s86, 128, %s3, [#allocation3]
    $region17: #{tpu_custom_call.1} parent=1 // pred_fallthru
      _
    // Predicated region
    $region18: #{tpu_custom_call.1} parent=1 // pred_check
      _
    $region19: #{tpu_custom_call.1} parent=1 // pred_check_branch
      %90 = sbr.rel (0) target = $region21
    $region20: #{tpu_custom_call.1} parent=1 // pred_region
      %91 = dma.done [#allocation3], 128
    $region21: #{tpu_custom_call.1} parent=1 // pred_fallthru
      _
    %92 = vsyncpa [#allocation3], 1

</llo_original>
